<compile_context>
chip_gen: v7x
topology: tpu7x:2x2x1
jax: 0.10.0
libtpu: 0.0.40
codegen_flags: <defaults>
</compile_context>

<pallas_src>
import jax
import jax.numpy as jnp
from jax.experimental import pallas as pl
from jax.experimental.pallas import tpu as pltpu

BN_EPS = 1e-5
_VMEM_LIMIT_BYTES = 48 * 1024 * 1024


def _round_up(x, m):
    return (x + m - 1) // m * m


def _bn_head(h1, a_bf, pvec_ref, w2a_ref, w2b_ref, ssum, ssq, inv_n, pad):
    """Shared BN (fused scale/shift) + fc2 + fc3 head. All math f32 except the
    bf16 matmul operands."""
    b1 = pvec_ref[0:1, :]
    gamma = pvec_ref[1:2, :]
    beta = pvec_ref[2:3, :]
    b2 = pvec_ref[3:4, :]
    w3row = pvec_ref[4:5, :]
    b3 = pvec_ref[5:6, 0:1]

    if pad:
        # Zero-padded rows contribute exactly relu(b1) to fc1 output: apply a
        # one-time static correction instead of per-row masking.
        pad_h = jnp.maximum(b1, 0.0)
        ssum = ssum - float(pad) * pad_h
        ssq = ssq - float(pad) * pad_h * pad_h

    mean = ssum * inv_n
    var = jnp.maximum(ssq * inv_n - mean * mean, 0.0)
    scale = gamma * jax.lax.rsqrt(var + BN_EPS)   # gamma folded into rsqrt
    shift = beta - mean * scale
    h1n = h1 * scale + shift

    # concat([h1n, a]) @ W2 == h1n @ W2a + a @ W2b  (bf16 operands, f32 accumulate)
    h2 = jnp.dot(h1n.astype(jnp.bfloat16), w2a_ref[...],
                 preferred_element_type=jnp.float32)
    h2 = h2 + jnp.dot(a_bf, w2b_ref[...], preferred_element_type=jnp.float32)
    h2 = jnp.maximum(h2 + b2, 0.0)

    # fc3: width-1 output -> VPU multiply + lane reduction (no MXU).
    return jnp.sum(h2 * w3row, axis=-1, keepdims=True) + b3


def _make_fast_kernel(n_valid, n_pad):
    """Single-pass kernel for nb == 1: fc1 once, stats from resident h1, head."""
    inv_n = 1.0 / float(n_valid)
    pad = n_pad - n_valid

    def kernel(s_ref, a_ref, w1_ref, w2a_ref, w2b_ref, pvec_ref, out_ref):
        b1 = pvec_ref[0:1, :]
        h1 = jnp.dot(s_ref[...], w1_ref[...], preferred_element_type=jnp.float32)
        h1 = jnp.maximum(h1 + b1, 0.0)

        ssum = jnp.sum(h1, axis=0, keepdims=True)
        ssq = jnp.sum(h1 * h1, axis=0, keepdims=True)

        out_ref[...] = _bn_head(h1, a_ref[...], pvec_ref, w2a_ref, w2b_ref,
                                ssum, ssq, inv_n, pad)

    return kernel


def _make_tiled_kernel(n_valid, n_pad):
    """Two-pass kernel: phase 0 accumulates BN stats, phase 1 normalizes + head.
    fc1 is recomputed in phase 1 (it is tiny) so h1 never round-trips to HBM."""
    inv_n = 1.0 / float(n_valid)
    pad = n_pad - n_valid

    def kernel(s_ref, a_ref, w1_ref, w2a_ref, w2b_ref, pvec_ref,
               out_ref, stats_ref):
        phase = pl.program_id(0)   # 0: accumulate BN stats, 1: normalize + head
        tile = pl.program_id(1)    # batch tile index

        b1 = pvec_ref[0:1, :]
        h1 = jnp.dot(s_ref[...], w1_ref[...], preferred_element_type=jnp.float32)
        h1 = jnp.maximum(h1 + b1, 0.0)

        @pl.when(jnp.logical_and(phase == 0, tile == 0))
        def _init():
            stats_ref[...] = jnp.zeros_like(stats_ref)

        @pl.when(phase == 0)
        def _accumulate():
            # No masking here: the pad-row contribution is corrected statically
            # in phase 1.  No output write either (phase 1 rewrites every block).
            stats_ref[0:1, :] = stats_ref[0:1, :] + jnp.sum(h1, axis=0, keepdims=True)
            stats_ref[1:2, :] = stats_ref[1:2, :] + jnp.sum(h1 * h1, axis=0, keepdims=True)

        @pl.when(phase == 1)
        def _head():
            out_ref[...] = _bn_head(h1, a_ref[...], pvec_ref, w2a_ref, w2b_ref,
                                    stats_ref[0:1, :], stats_ref[1:2, :],
                                    inv_n, pad)

    return kernel


def critic_forward(state, action, params, *, tile_batch=4096):
    n, s_dim = state.shape
    a_dim = action.shape[1]
    h1u = params["w1"].shape[1]
    h2u = params["w2a"].shape[1]
    assert h1u == h2u, "kernel assumes fc1_units == fc2_units (default 128)"
    h = h1u

    # Batch tiling (pad batch to a multiple of the tile size).
    tb = min(_round_up(n, 8), _round_up(tile_batch, 8))
    n_pad = _round_up(n, tb)
    nb = n_pad // tb
    if n_pad != n:
        pad = n_pad - n
        state = jnp.pad(state, ((0, pad), (0, 0)))
        action = jnp.pad(action, ((0, pad), (0, 0)))

    # bf16 matmul operands (fewer MXU passes, half the DMA bytes); BN params,
    # biases and the fc3 row stay f32.
    state_bf = state.astype(jnp.bfloat16)
    action_bf = action.astype(jnp.bfloat16)
    w1 = params["w1"].astype(jnp.bfloat16)
    w2a = params["w2a"].astype(jnp.bfloat16)
    w2b = params["w2b"].astype(jnp.bfloat16)

    # Consolidated small-parameter operand: rows = b1, gamma, beta, b2, w3_row, b3.
    pvec = jnp.concatenate(
        [params["b1"], params["gamma"], params["beta"], params["b2"],
         params["w3t"], jnp.broadcast_to(params["b3"], (1, h))],
        axis=0).astype(jnp.float32)                                   # (6, h)

    if nb == 1:
        # ---- single-tile fast path: one grid step, no stats scratch ----------
        kernel = _make_fast_kernel(n, n_pad)
        out = pl.pallas_call(
            kernel,
            out_shape=jax.ShapeDtypeStruct((n_pad, 1), jnp.float32),
            grid_spec=pltpu.PrefetchScalarGridSpec(
                num_scalar_prefetch=0,
                grid=(1,),
                in_specs=[
                    pl.BlockSpec((tb, s_dim), lambda i: (0, 0)),   # state
                    pl.BlockSpec((tb, a_dim), lambda i: (0, 0)),   # action
                    pl.BlockSpec((s_dim, h), lambda i: (0, 0)),    # w1
                    pl.BlockSpec((h, h), lambda i: (0, 0)),        # w2a
                    pl.BlockSpec((a_dim, h), lambda i: (0, 0)),    # w2b
                    pl.BlockSpec((6, h), lambda i: (0, 0)),        # stacked params
                ],
                out_specs=pl.BlockSpec((tb, 1), lambda i: (0, 0)),
            ),
            compiler_params=pltpu.CompilerParams(
                dimension_semantics=("arbitrary",),
                vmem_limit_bytes=_VMEM_LIMIT_BYTES),
        )(state_bf, action_bf, w1, w2a, w2b, pvec)
    else:
        # ---- multi-tile two-pass path (streaming batches) ---------------------
        kernel = _make_tiled_kernel(n, n_pad)
        out = pl.pallas_call(
            kernel,
            out_shape=jax.ShapeDtypeStruct((n_pad, 1), jnp.float32),
            grid_spec=pltpu.PrefetchScalarGridSpec(
                num_scalar_prefetch=0,
                grid=(2, nb),                                      # (phase, batch tile)
                in_specs=[
                    pl.BlockSpec((tb, s_dim), lambda p, i: (i, 0)),   # state tile
                    pl.BlockSpec((tb, a_dim), lambda p, i: (i, 0)),   # action tile
                    pl.BlockSpec((s_dim, h), lambda p, i: (0, 0)),    # w1
                    pl.BlockSpec((h, h), lambda p, i: (0, 0)),        # w2a
                    pl.BlockSpec((a_dim, h), lambda p, i: (0, 0)),    # w2b
                    pl.BlockSpec((6, h), lambda p, i: (0, 0)),        # stacked params
                ],
                out_specs=pl.BlockSpec((tb, 1), lambda p, i: (i, 0)),
                scratch_shapes=[pltpu.VMEM((2, h), jnp.float32)],     # [sum; sum_sq]
            ),
            compiler_params=pltpu.CompilerParams(
                dimension_semantics=("arbitrary", "arbitrary"),
                vmem_limit_bytes=_VMEM_LIMIT_BYTES),
        )(state_bf, action_bf, w1, w2a, w2b, pvec)
    return out[:n]


# ----------------------------------------------------------------------------
# Parameter init (matches the PyTorch module: xavier_uniform weights, bias 0.1)
# ----------------------------------------------------------------------------
def xavier_uniform(key, fan_in, fan_out):
    bound = (6.0 / (fan_in + fan_out)) ** 0.5
    # PyTorch Linear stores (out, in); we store transposed (in, out) for x @ W.
    return jax.random.uniform(key, (fan_in, fan_out), jnp.float32, -bound, bound)


def init_params(key, state_size, action_size, fc1_units=128, fc2_units=128):
    k1, k2, k3 = jax.random.split(key, 3)
    w1 = xavier_uniform(k1, state_size, fc1_units)
    b1 = jnp.full((1, fc1_units), 0.1, jnp.float32)
    gamma = jnp.ones((1, fc1_units), jnp.float32)
    beta = jnp.zeros((1, fc1_units), jnp.float32)
    w2 = xavier_uniform(k2, fc1_units + action_size, fc2_units)
    w2a, w2b = w2[:fc1_units], w2[fc1_units:]
    b2 = jnp.full((1, fc2_units), 0.1, jnp.float32)
    w3t = xavier_uniform(k3, fc2_units, 1).T          # stored transposed: (1, fc2)
    b3 = jnp.full((1, 1), 0.1, jnp.float32)
    return dict(w1=w1, b1=b1, gamma=gamma, beta=beta,
                w2a=w2a, w2b=w2b, b2=b2, w3t=w3t, b3=b3)


# ----------------------------------------------------------------------------
# References
# ----------------------------------------------------------------------------
def critic_reference(state, action, p):
    """Exact f32 reference of the PyTorch forward (training-mode BatchNorm)."""
    h1 = jnp.maximum(state @ p["w1"] + p["b1"], 0.0)
    mean = jnp.mean(h1, axis=0, keepdims=True)
    var = jnp.mean((h1 - mean) ** 2, axis=0, keepdims=True)
    h1n = (h1 - mean) / jnp.sqrt(var + BN_EPS) * p["gamma"] + p["beta"]
    cat = jnp.concatenate([h1n, action], axis=1)
    w2 = jnp.concatenate([p["w2a"], p["w2b"]], axis=0)
    h2 = jnp.maximum(cat @ w2 + p["b2"], 0.0)
    return h2 @ p["w3t"].T + p["b3"]


def critic_reference_mixed(state, action, p):
    """Reference using the kernel's precision policy (bf16 matmul operands,
    f32 accumulation, f32 BN math) for a tight-tolerance comparison."""
    bf, f32 = jnp.bfloat16, jnp.float32
    h1 = jnp.dot(state.astype(bf), p["w1"].astype(bf), preferred_element_type=f32)
    h1 = jnp.maximum(h1 + p["b1"], 0.0)
    mean = jnp.mean(h1, axis=0, keepdims=True)
    var = jnp.maximum(jnp.mean(h1 * h1, axis=0, keepdims=True) - mean * mean, 0.0)
    scale = p["gamma"] * jax.lax.rsqrt(var + BN_EPS)
    shift = p["beta"] - mean * scale
    h1n = h1 * scale + shift
    h2 = (jnp.dot(h1n.astype(bf), p["w2a"].astype(bf), preferred_element_type=f32)
          + jnp.dot(action.astype(bf), p["w2b"].astype(bf), preferred_element_type=f32))
    h2 = jnp.maximum(h2 + p["b2"], 0.0)
    return jnp.sum(h2 * p["w3t"], axis=-1, keepdims=True) + p["b3"]


if __name__ == "__main__":
    state_size, action_size = 16, 4
    params = init_params(jax.random.PRNGKey(0), state_size, action_size)

    def check(name, batch, tile_batch, seed):
        ks_, ka_ = jax.random.split(jax.random.PRNGKey(seed))
        state = jax.random.normal(ks_, (batch, state_size), jnp.float32)
        action = jax.random.normal(ka_, (batch, action_size), jnp.float32)
        q = jax.block_until_ready(
            critic_forward(state, action, params, tile_batch=tile_batch))
        assert q.shape == (batch, 1), f"{name}: bad output shape {q.shape}"
        q_mix = critic_reference_mixed(state, action, params)
        q_f32 = critic_reference(state, action, params)
        assert jnp.allclose(q, q_mix, atol=2e-3, rtol=2e-3), \
            f"{name}: mismatch vs matched-precision reference"
        # bf16 matmul operands drift slightly from the exact-f32 PyTorch math.
        assert jnp.allclose(q, q_f32, atol=1e-1, rtol=1e-1), \
            f"{name}: drifted too far from exact f32 reference"

    # 1) single-tile fast path, no padding
    check("fast path (nb==1)", batch=8, tile_batch=4096, seed=1)
    # 2) multi-tile two-pass path with pad correction
    check("two-pass tiled path", batch=300, tile_batch=128, seed=2)
    # 3) single-tile fast path with padded rows (static stats correction)
    check("fast path with padding", batch=300, tile_batch=4096, seed=3)

    print("KERNEL_OK")
</pallas_src>

<mosaic_0001>
module attributes {stable_mosaic.version = 11 : i64} {
  func.func @kernel(%arg0: i32, %arg1: memref<8x16xbf16, #tpu.memory_space<vmem>>, %arg2: memref<8x4xbf16, #tpu.memory_space<vmem>>, %arg3: memref<16x128xbf16, #tpu.memory_space<vmem>>, %arg4: memref<128x128xbf16, #tpu.memory_space<vmem>>, %arg5: memref<4x128xbf16, #tpu.memory_space<vmem>>, %arg6: memref<6x128xf32, #tpu.memory_space<vmem>>, %arg7: memref<8x1xf32, #tpu.memory_space<vmem>>) attributes {dimension_semantics = [#tpu.dimension_semantics<arbitrary>], iteration_bounds = array<i64: 1>, scalar_prefetch = 0 : i64, scratch_operands = 0 : i64, tpu.core_type = #tpu.core_type<tc>, window_params = [{pipeline_mode = #tpu.pipeline_mode<synchronous>, transform_indices = @transform_0, window_bounds = array<i64: 8, 16>}, {pipeline_mode = #tpu.pipeline_mode<synchronous>, transform_indices = @transform_1, window_bounds = array<i64: 8, 4>}, {pipeline_mode = #tpu.pipeline_mode<synchronous>, transform_indices = @transform_2, window_bounds = array<i64: 16, 128>}, {pipeline_mode = #tpu.pipeline_mode<synchronous>, transform_indices = @transform_3, window_bounds = array<i64: 128, 128>}, {pipeline_mode = #tpu.pipeline_mode<synchronous>, transform_indices = @transform_4, window_bounds = array<i64: 4, 128>}, {pipeline_mode = #tpu.pipeline_mode<synchronous>, transform_indices = @transform_5, window_bounds = array<i64: 6, 128>}, {pipeline_mode = #tpu.pipeline_mode<synchronous>, transform_indices = @transform_6, window_bounds = array<i64: 8, 1>}]} {
    %c0 = arith.constant 0 : index
    %c0_0 = arith.constant 0 : index
    %0 = vector.load %arg6[%c0, %c0_0] : memref<6x128xf32, #tpu.memory_space<vmem>>, vector<1x128xf32>
    %c0_1 = arith.constant 0 : index
    %c0_2 = arith.constant 0 : index
    %1 = vector.load %arg1[%c0_1, %c0_2] : memref<8x16xbf16, #tpu.memory_space<vmem>>, vector<8x16xbf16>
    %c0_3 = arith.constant 0 : index
    %c0_4 = arith.constant 0 : index
    %2 = vector.load %arg3[%c0_3, %c0_4] : memref<16x128xbf16, #tpu.memory_space<vmem>>, vector<16x128xbf16>
    %cst = arith.constant dense<0.000000e+00> : vector<8x128xf32>
    %3 = tpu.matmul %1, %2, %cst {dimension_numbers = #tpu.dot_dimension_numbers<[1], [0], [0], [1], [0, 0, 1, 1], [], []>} : vector<8x16xbf16>, vector<16x128xbf16>, vector<8x128xf32> -> vector<8x128xf32>
    %4 = vector.broadcast %0 : vector<1x128xf32> to vector<8x128xf32>
    %5 = arith.addf %3, %4 : vector<8x128xf32>
    %cst_5 = arith.constant 0.000000e+00 : f32
    %6 = vector.broadcast %cst_5 : f32 to vector<8x128xf32>
    %7 = arith.maximumf %5, %6 : vector<8x128xf32>
    %cst_6 = arith.constant dense<0.000000e+00> : vector<128xf32>
    %8 = vector.multi_reduction <add>, %7, %cst_6 [0] : vector<8x128xf32> to vector<128xf32>
    %9 = vector.shape_cast %8 : vector<128xf32> to vector<1x128xf32>
    %10 = arith.mulf %7, %7 : vector<8x128xf32>
    %cst_7 = arith.constant dense<0.000000e+00> : vector<128xf32>
    %11 = vector.multi_reduction <add>, %10, %cst_7 [0] : vector<8x128xf32> to vector<128xf32>
    %12 = vector.shape_cast %11 : vector<128xf32> to vector<1x128xf32>
    %c0_8 = arith.constant 0 : index
    %c0_9 = arith.constant 0 : index
    %13 = vector.load %arg2[%c0_8, %c0_9] : memref<8x4xbf16, #tpu.memory_space<vmem>>, vector<8x4xbf16>
    %c1 = arith.constant 1 : index
    %c0_10 = arith.constant 0 : index
    %14 = vector.load %arg6[%c1, %c0_10] : memref<6x128xf32, #tpu.memory_space<vmem>>, vector<1x128xf32>
    %c2 = arith.constant 2 : index
    %c0_11 = arith.constant 0 : index
    %15 = vector.load %arg6[%c2, %c0_11] : memref<6x128xf32, #tpu.memory_space<vmem>>, vector<1x128xf32>
    %c3 = arith.constant 3 : index
    %c0_12 = arith.constant 0 : index
    %16 = vector.load %arg6[%c3, %c0_12] : memref<6x128xf32, #tpu.memory_space<vmem>>, vector<1x128xf32>
    %c4 = arith.constant 4 : index
    %c0_13 = arith.constant 0 : index
    %17 = vector.load %arg6[%c4, %c0_13] : memref<6x128xf32, #tpu.memory_space<vmem>>, vector<1x128xf32>
    %c5 = arith.constant 5 : index
    %c0_14 = arith.constant 0 : index
    %18 = vector.load %arg6[%c5, %c0_14] : memref<6x128xf32, #tpu.memory_space<vmem>>, vector<1x1xf32>
    %cst_15 = arith.constant 1.250000e-01 : f32
    %19 = vector.broadcast %cst_15 : f32 to vector<1x128xf32>
    %20 = arith.mulf %9, %19 : vector<1x128xf32>
    %cst_16 = arith.constant 1.250000e-01 : f32
    %21 = vector.broadcast %cst_16 : f32 to vector<1x128xf32>
    %22 = arith.mulf %12, %21 : vector<1x128xf32>
    %23 = arith.mulf %20, %20 : vector<1x128xf32>
    %24 = arith.subf %22, %23 : vector<1x128xf32>
    %cst_17 = arith.constant 0.000000e+00 : f32
    %25 = vector.broadcast %cst_17 : f32 to vector<1x128xf32>
    %26 = arith.maximumf %24, %25 : vector<1x128xf32>
    %cst_18 = arith.constant 9.99999974E-6 : f32
    %27 = vector.broadcast %cst_18 : f32 to vector<1x128xf32>
    %28 = arith.addf %26, %27 : vector<1x128xf32>
    %29 = math.rsqrt %28 : vector<1x128xf32>
    %30 = arith.mulf %14, %29 : vector<1x128xf32>
    %31 = arith.mulf %20, %30 : vector<1x128xf32>
    %32 = arith.subf %15, %31 : vector<1x128xf32>
    %33 = vector.broadcast %30 : vector<1x128xf32> to vector<8x128xf32>
    %34 = arith.mulf %7, %33 : vector<8x128xf32>
    %35 = vector.broadcast %32 : vector<1x128xf32> to vector<8x128xf32>
    %36 = arith.addf %34, %35 : vector<8x128xf32>
    %37 = arith.truncf %36 : vector<8x128xf32> to vector<8x128xbf16>
    %c0_19 = arith.constant 0 : index
    %c0_20 = arith.constant 0 : index
    %38 = vector.load %arg4[%c0_19, %c0_20] : memref<128x128xbf16, #tpu.memory_space<vmem>>, vector<128x128xbf16>
    %cst_21 = arith.constant dense<0.000000e+00> : vector<8x128xf32>
    %39 = tpu.matmul %37, %38, %cst_21 {dimension_numbers = #tpu.dot_dimension_numbers<[1], [0], [0], [1], [0, 0, 1, 1], [], []>} : vector<8x128xbf16>, vector<128x128xbf16>, vector<8x128xf32> -> vector<8x128xf32>
    %c0_22 = arith.constant 0 : index
    %c0_23 = arith.constant 0 : index
    %40 = vector.load %arg5[%c0_22, %c0_23] : memref<4x128xbf16, #tpu.memory_space<vmem>>, vector<4x128xbf16>
    %cst_24 = arith.constant dense<0.000000e+00> : vector<8x128xf32>
    %41 = tpu.matmul %13, %40, %cst_24 {dimension_numbers = #tpu.dot_dimension_numbers<[1], [0], [0], [1], [0, 0, 1, 1], [], []>} : vector<8x4xbf16>, vector<4x128xbf16>, vector<8x128xf32> -> vector<8x128xf32>
    %42 = arith.addf %39, %41 : vector<8x128xf32>
    %43 = vector.broadcast %16 : vector<1x128xf32> to vector<8x128xf32>
    %44 = arith.addf %42, %43 : vector<8x128xf32>
    %cst_25 = arith.constant 0.000000e+00 : f32
    %45 = vector.broadcast %cst_25 : f32 to vector<8x128xf32>
    %46 = arith.maximumf %44, %45 : vector<8x128xf32>
    %47 = vector.broadcast %17 : vector<1x128xf32> to vector<8x128xf32>
    %48 = arith.mulf %46, %47 : vector<8x128xf32>
    %cst_26 = arith.constant dense<0.000000e+00> : vector<8xf32>
    %49 = vector.multi_reduction <add>, %48, %cst_26 [1] : vector<8x128xf32> to vector<8xf32>
    %50 = vector.shape_cast %49 : vector<8xf32> to vector<8x1xf32>
    %51 = vector.broadcast %18 : vector<1x1xf32> to vector<8x1xf32>
    %52 = arith.addf %50, %51 : vector<8x1xf32>
    %c0_27 = arith.constant 0 : index
    %c0_28 = arith.constant 0 : index
    %53 = vector.load %arg7[%c0_27, %c0_28] : memref<8x1xf32, #tpu.memory_space<vmem>>, vector<8x1xf32>
    tpu.vector_store %arg7[%c0_27, %c0_28], %52 {strides = array<i32>} : memref<8x1xf32, #tpu.memory_space<vmem>>, vector<8x1xf32>,
    return
  }
  func.func @transform_0(%arg0: i32) -> (i32, i32) {
    %c0_i32 = arith.constant 0 : i32
    %c0_i32_0 = arith.constant 0 : i32
    %c0_i32_1 = arith.constant 0 : i32
    return %c0_i32, %c0_i32_0 : i32, i32
  }
  func.func @transform_1(%arg0: i32) -> (i32, i32) {
    %c0_i32 = arith.constant 0 : i32
    %c0_i32_0 = arith.constant 0 : i32
    %c0_i32_1 = arith.constant 0 : i32
    return %c0_i32, %c0_i32_0 : i32, i32
  }
  func.func @transform_2(%arg0: i32) -> (i32, i32) {
    %c0_i32 = arith.constant 0 : i32
    %c0_i32_0 = arith.constant 0 : i32
    %c0_i32_1 = arith.constant 0 : i32
    return %c0_i32, %c0_i32_0 : i32, i32
  }
  func.func @transform_3(%arg0: i32) -> (i32, i32) {
    %c0_i32 = arith.constant 0 : i32
    %c0_i32_0 = arith.constant 0 : i32
    %c0_i32_1 = arith.constant 0 : i32
    return %c0_i32, %c0_i32_0 : i32, i32
  }
  func.func @transform_4(%arg0: i32) -> (i32, i32) {
    %c0_i32 = arith.constant 0 : i32
    %c0_i32_0 = arith.constant 0 : i32
    %c0_i32_1 = arith.constant 0 : i32
    return %c0_i32, %c0_i32_0 : i32, i32
  }
  func.func @transform_5(%arg0: i32) -> (i32, i32) {
    %c0_i32 = arith.constant 0 : i32
    %c0_i32_0 = arith.constant 0 : i32
    %c0_i32_1 = arith.constant 0 : i32
    return %c0_i32, %c0_i32_0 : i32, i32
  }
  func.func @transform_6(%arg0: i32) -> (i32, i32) {
    %c0_i32 = arith.constant 0 : i32
    %c0_i32_0 = arith.constant 0 : i32
    %c0_i32_1 = arith.constant 0 : i32
    return %c0_i32, %c0_i32_0 : i32, i32
  }
}

</mosaic_0001>

<llo_original>
// kernel: tpu_custom_call.1
$region0: #{tpu_custom_call.1}
  #allocation0 [shape = 'u32[]', space=smem, size = 0x4, offset = 0x4, fixed_abs, tag = 'smem constant byte address 0x4 - core index']
  #allocation1 [shape = 'u32[144,128]{1,0:T(1,128)}', space=vmem, size = 0x12000, scoped, tag = 'internal scratch']
  %s0 = inlined_call_operand.hbm [shape: bf16[8,16], index: 0, kind: input, shape index: {}]
  %s1 = inlined_call_operand.vmem [shape: bf16[8,4], index: 1, kind: input, shape index: {}]
  %s2 = inlined_call_operand.vmem [shape: bf16[16,128], index: 2, kind: input, shape index: {}]
  %s3 = inlined_call_operand.hbm [shape: bf16[128,128], index: 3, kind: input, shape index: {}]
  %s4 = inlined_call_operand.vmem [shape: bf16[4,128], index: 4, kind: input, shape index: {}]
  %s5 = inlined_call_operand.vmem [shape: f32[6,128], index: 5, kind: input, shape index: {}]
  %s6 = inlined_call_operand.vmem [shape: f32[8,1], index: 6, kind: output, shape index: {}]
  %s7 = sld [smem:[#allocation0]]
  $region42: #{tpu_custom_call.1} parent=0
    _
  %s9 = ssub.s32 1, %s7
  %s10 = scalar_select 0, %s9, %s7
  $region1: #{tpu_custom_call.1} parent=0
    #allocation2 [shape = 'u8[2048]{0}', space=vmem, size = 0x800, scoped, tag = 'input window, operand 0, single buffered']
    #allocation3 [shape = 's32[1]{0}', space=sflag, size = 0x4, scoped, tag = 'scoped memory for tpu_custom_call.1']
    #allocation4 [shape = 'u8[32768]{0}', space=vmem, size = 0x8000, scoped, tag = 'input window, operand 3, single buffered']
    #allocation5 [shape = 's32[1]{0}', space=sflag, size = 0x4, scoped, tag = 'scoped memory for tpu_custom_call.1']
    %11 = vsyncpa [#allocation3], 0
    %12 = vsyncpa [#allocation5], 0
    // Predicated region
    $region2: #{tpu_custom_call.1} parent=1 // pred_check
      _
    $region3: #{tpu_custom_call.1} parent=1 // pred_check_branch
      %14 = sbr.rel (0) target = $region5
    $region4: #{tpu_custom_call.1} parent=1 // pred_region
      %s16 = ssub.s32 64, 64
      %17 = vsyncadd [#allocation3], %s16
      %s19 = sshll.u32 [#allocation2], 4
      %s20 = int_to_ptr.vmem [resolvable:$true] %s19
      %22 = dma.hbm_to_vmem [thread:$0]  %s0, 64, %s20, [#allocation3]
    $region5: #{tpu_custom_call.1} parent=1 // pred_fallthru
      _
    // Predicated region
    $region6: #{tpu_custom_call.1} parent=1 // pred_check
      _
    $region7: #{tpu_custom_call.1} parent=1 // pred_check_branch
      %24 = sbr.rel (0) target = $region9
    $region8: #{tpu_custom_call.1} parent=1 // pred_region
      _
    $region9: #{tpu_custom_call.1} parent=1 // pred_fallthru
      _
    // Predicated region
    $region10: #{tpu_custom_call.1} parent=1 // pred_check
      _
    $region11: #{tpu_custom_call.1} parent=1 // pred_check_branch
      %26 = sbr.rel (0) target = $region13
    $region12: #{tpu_custom_call.1} parent=1 // pred_region
      _
    $region13: #{tpu_custom_call.1} parent=1 // pred_fallthru
      _
    // Predicated region
    $region14: #{tpu_custom_call.1} parent=1 // pred_check
      _
    $region15: #{tpu_custom_call.1} parent=1 // pred_check_branch
      %28 = sbr.rel (0) target = $region17
    $region16: #{tpu_custom_call.1} parent=1 // pred_region
      %s30 = ssub.s32 1024, 1024
      %31 = vsyncadd [#allocation5], %s30
      %s32 = sshll.u32 [#allocation4], 4
      %s33 = int_to_ptr.vmem [resolvable:$true] %s32
      %38 = dma.hbm_to_vmem [thread:$0]  %s3, 1024, %s33, [#allocation5], 64, 64, 4
    $region17: #{tpu_custom_call.1} parent=1 // pred_fallthru
      _
    // Predicated region
    $region18: #{tpu_custom_call.1} parent=1 // pred_check
      _
    $region19: #{tpu_custom_call.1} parent=1 // pred_check_branch
      %40 = sbr.rel (0) target = $region21
    $region20: #{tpu_custom_call.1} parent=1 // pred_region
      _
    $region21: #{tpu_custom_call.1} parent=1 // pred_fallthru
      _
    // Predicated region
    $region22: #{tpu_custom_call.1} parent=1 // pred_check
      _
    $region23: #{tpu_custom_call.1} parent=1 // pred_check_branch
      %42 = sbr.rel (0) target = $region25
    $region24: #{tpu_custom_call.1} parent=1 // pred_region
      _
    $region25: #{tpu_custom_call.1} parent=1 // pred_fallthru
      _
    // Predicated region
    $region26: #{tpu_custom_call.1} parent=1 // pred_check
      _
    $region27: #{tpu_custom_call.1} parent=1 // pred_check_branch
      %44 = sbr.rel (0) target = $region29
    $region28: #{tpu_custom_call.1} parent=1 // pred_region
      %45 = dma.done [#allocation3], 64
    $region29: #{tpu_custom_call.1} parent=1 // pred_fallthru
      _
    // Predicated region
    $region30: #{tpu_custom_call.1} parent=1 // pred_check
      _
    $region31: #{tpu_custom_call.1} parent=1 // pred_check_branch
      %47 = sbr.rel (0) target = $region33
    $region32: #{tpu_custom_call.1} parent=1 // pred_region
      %48 = dma.done [#allocation5], 1024
    $region33: #{tpu_custom_call.1} parent=1 // pred_fallthru
      _
    %v50 = vld [vmem:[%s5] sm:$0x1]
    %v51 = vld [vmem:[#allocation2] sm:$0xf]
    %v52 = vld [vmem:[%s2] sm:$0xf]
    %v53 = vld [vmem:[%s2 + $0x4] sm:$0xf]
    %v54 = vlaneseq
    %v55 = vshrl.u32 %v54, 7
    %v56 = vsub.s32 0, %v55
    %v57 = vrot.slane %v50, %v56
    %v60 = vunpack.c.l.b16 %v52
    %v61 = vunpack.c.l.b16 %v53
    %v62 = vpack.c.b16 %v61, %v60
    %vm64 = vcmask 130048
    %v66 = vsel %vm64, %v51, 0
    %68 = vmatprep.subr.bf16.mxu0 0
    %69 = vmatpush1.bf16.msra.mxu0 %v62
    %70 = vmatprep.subr.bf16.mxu0 0
    %71 = vmatpush1.bf16.msra.mxu0 0
    %72 = vmatprep.subr.bf16.mxu0 0
    %73 = vmatpush1.bf16.msra.mxu0 0
    %74 = vmatprep.subr.bf16.mxu0 0
    %75 = vmatpush1.bf16.msra.mxu0 0
    %76 = vmatprep.subr.bf16.mxu0 0
    %77 = vmatpush1.bf16.msra.mxu0 0
    %78 = vmatprep.subr.bf16.mxu0 0
    %79 = vmatpush1.bf16.msra.mxu0 0
    %80 = vmatprep.subr.bf16.mxu0 0
    %81 = vmatpush1.bf16.msra.mxu0 0
    %82 = vmatprep.subr.bf16.mxu0 0
    %83 = vmatpush1.bf16.msra.mxu0 0
    %84 = vmatprep.subr.bf16.mxu0 0
    %85 = vmatpush1.bf16.msra.mxu0 0
    %86 = vmatprep.subr.bf16.mxu0 0
    %87 = vmatpush1.bf16.msra.mxu0 0
    %88 = vmatprep.subr.bf16.mxu0 0
    %89 = vmatpush1.bf16.msra.mxu0 0
    %90 = vmatprep.subr.bf16.mxu0 0
    %91 = vmatpush1.bf16.msra.mxu0 0
    %92 = vmatprep.subr.bf16.mxu0 0
    %93 = vmatpush1.bf16.msra.mxu0 0
    %94 = vmatprep.subr.bf16.mxu0 0
    %95 = vmatpush1.bf16.msra.mxu0 0
    %96 = vmatprep.subr.bf16.mxu0 0
    %97 = vmatpush1.bf16.msra.mxu0 0
    %98 = vmatprep.subr.bf16.mxu0 0
    %99 = vmatpush1.bf16.msra.mxu0 0
    %100 = vmatprep.mubr.bf16.mxu0 0
    %101 = vmatmul.mubr.bf16.gmra.mrb[0].mxu0 %v66
    %v102 = vpop.f32.mrb[0].mxu0
    %v103 = vadd.f32 %v57, %v102
    %v104 = vpop.f32.mrb[0].mxu0
    %v105 = vpop.f32.mrb[0].mxu0
    %v106 = vpop.f32.mrb[0].mxu0
    %107 = vdwg.mxu0
    %v108 = vmax.f32 %v103, 0.0
    %v109 = vrot.slane %v108, 4
    %v110 = vadd.f32 %v108, %v109
    %v111 = vrot.slane %v110, 2
    %v112 = vadd.f32 %v110, %v111
    %v113 = vrot.slane %v112, 1
    %v114 = vadd.f32 %v112, %v113
    %v115 = vmul.f32 %v108, %v108
    %v116 = vrot.slane %v115, 4
    %v117 = vadd.f32 %v115, %v116
    %v118 = vrot.slane %v117, 2
    %v119 = vadd.f32 %v117, %v118
    %v120 = vrot.slane %v119, 1
    %v121 = vadd.f32 %v119, %v120
    %v122 = vld [vmem:[%s1] sm:$0xf]
    %v123 = vld [vmem:[%s5 + $0x1] sm:$0x1]
    %v124 = vld [vmem:[%s5 + $0x2] sm:$0x1]
    %v125 = vld [vmem:[%s5 + $0x3] sm:$0x1]
    %v126 = vld [vmem:[%s5 + $0x4] sm:$0x1]
    %v127 = vld [vmem:[%s5 + $0x5] sm:$0x1]
    %v128 = vmul.f32 %v114, 0.125
    %v129 = vmul.f32 %v121, 0.125
    %v130 = vmul.f32 %v128, %v128
    %v131 = vsub.f32 %v129, %v130
    %v132 = vmax.f32 %v131, 0.0
    %v133 = vadd.f32 %v132, 1e-05
    %v134 = vrsqrt.pop %v133
    %v135 = vmul.f32 %v123, %v134
    %v136 = vmul.f32 %v128, %v135
    %v137 = vsub.f32 %v124, %v136
    %v138 = vlaneseq
    %v139 = vshrl.u32 %v138, 7
    %v140 = vsub.s32 0, %v139
    %v141 = vrot.slane %v135, %v140
    %v142 = vmul.f32 %v108, %v141
    %v143 = vlaneseq
    %v144 = vshrl.u32 %v143, 7
    %v145 = vsub.s32 0, %v144
    %v146 = vrot.slane %v137, %v145
    %v147 = vadd.f32 %v142, %v146
    %v148 = vpack.c.bf16 %v147, %v147
    %v149 = vld [vmem:[#allocation4] sm:$0xf]
    %v150 = vld [vmem:[#allocation4 + $0x4] sm:$0xf]
    %v151 = vld [vmem:[#allocation4 + $0x8] sm:$0xf]
    %v152 = vld [vmem:[#allocation4 + $0xc] sm:$0xf]
    %v153 = vld [vmem:[#allocation4 + $0x10] sm:$0xf]
    %v154 = vld [vmem:[#allocation4 + $0x14] sm:$0xf]
    %v155 = vld [vmem:[#allocation4 + $0x18] sm:$0xf]
    %v156 = vld [vmem:[#allocation4 + $0x1c] sm:$0xf]
    %v157 = vld [vmem:[#allocation4 + $0x20] sm:$0xf]
    %v158 = vld [vmem:[#allocation4 + $0x24] sm:$0xf]
    %v159 = vld [vmem:[#allocation4 + $0x28] sm:$0xf]
    %v160 = vld [vmem:[#allocation4 + $0x2c] sm:$0xf]
    %v161 = vld [vmem:[#allocation4 + $0x30] sm:$0xf]
    %v162 = vld [vmem:[#allocation4 + $0x34] sm:$0xf]
    %v163 = vld [vmem:[#allocation4 + $0x38] sm:$0xf]
    %v164 = vld [vmem:[#allocation4 + $0x3c] sm:$0xf]
    %v165 = vld [vmem:[%s4] sm:$0x3]
    %vm166 = vcmask 31744
    %v168 = vsel %vm166, %v122, 0
    %vm170 = vcmask 1041408
    %v172 = vsel %vm170, %v165, 0
    %174 = vmatprep.subr.bf16.mxu0 0
    %175 = vmatpush1.bf16.msra.mxu0 %v172
    %176 = vmatprep.subr.bf16.mxu0 0
    %177 = vmatpush1.bf16.msra.mxu0 0
    %178 = vmatprep.subr.bf16.mxu0 0
    %179 = vmatpush1.bf16.msra.mxu0 0
    %180 = vmatprep.subr.bf16.mxu0 0
    %181 = vmatpush1.bf16.msra.mxu0 0
    %182 = vmatprep.subr.bf16.mxu0 0
    %183 = vmatpush1.bf16.msra.mxu0 0
    %184 = vmatprep.subr.bf16.mxu0 0
    %185 = vmatpush1.bf16.msra.mxu0 0
    %186 = vmatprep.subr.bf16.mxu0 0
    %187 = vmatpush1.bf16.msra.mxu0 0
    %188 = vmatprep.subr.bf16.mxu0 0
    %189 = vmatpush1.bf16.msra.mxu0 0
    %190 = vmatprep.subr.bf16.mxu0 0
    %191 = vmatpush1.bf16.msra.mxu0 0
    %192 = vmatprep.subr.bf16.mxu0 0
    %193 = vmatpush1.bf16.msra.mxu0 0
    %194 = vmatprep.subr.bf16.mxu0 0
    %195 = vmatpush1.bf16.msra.mxu0 0
    %196 = vmatprep.subr.bf16.mxu0 0
    %197 = vmatpush1.bf16.msra.mxu0 0
    %198 = vmatprep.subr.bf16.mxu0 0
    %199 = vmatpush1.bf16.msra.mxu0 0
    %200 = vmatprep.subr.bf16.mxu0 0
    %201 = vmatpush1.bf16.msra.mxu0 0
    %202 = vmatprep.subr.bf16.mxu0 0
    %203 = vmatpush1.bf16.msra.mxu0 0
    %204 = vmatprep.subr.bf16.mxu0 0
    %205 = vmatpush1.bf16.msra.mxu0 0
    %206 = vmatprep.mubr.bf16.mxu0 0
    %207 = vmatmul.mubr.bf16.gmra.mrb[0].mxu0 %v168
    %v208 = vpop.f32.mrb[0].mxu0
    %v209 = vadd.f32 0.0, %v208
    %v210 = vpop.f32.mrb[0].mxu0
    %v211 = vpop.f32.mrb[0].mxu0
    %v212 = vpop.f32.mrb[0].mxu0
    %213 = vdwg.mxu0
    %v230 = vunpack.c.l.b16 %v149
    %v231 = vunpack.c.l.b16 %v150
    %v232 = vunpack.c.l.b16 %v151
    %v233 = vunpack.c.l.b16 %v152
    %v234 = vunpack.c.l.b16 %v153
    %v235 = vunpack.c.l.b16 %v154
    %v236 = vunpack.c.l.b16 %v155
    %v237 = vunpack.c.l.b16 %v156
    %v238 = vunpack.c.l.b16 %v157
    %v239 = vunpack.c.l.b16 %v158
    %v240 = vunpack.c.l.b16 %v159
    %v241 = vunpack.c.l.b16 %v160
    %v242 = vunpack.c.l.b16 %v161
    %v243 = vunpack.c.l.b16 %v162
    %v244 = vunpack.c.l.b16 %v163
    %v245 = vunpack.c.l.b16 %v164
    %v246 = vpack.c.b16 %v231, %v230
    %v247 = vpack.c.b16 %v233, %v232
    %v248 = vpack.c.b16 %v235, %v234
    %v249 = vpack.c.b16 %v237, %v236
    %v250 = vpack.c.b16 %v239, %v238
    %v251 = vpack.c.b16 %v241, %v240
    %v252 = vpack.c.b16 %v243, %v242
    %v253 = vpack.c.b16 %v245, %v244
    %262 = vmatprep.subr.bf16.mxu0 0
    %263 = vmatpush1.bf16.msra.mxu0 %v246
    %264 = vmatprep.subr.bf16.mxu0 0
    %265 = vmatpush1.bf16.msra.mxu0 %v247
    %266 = vmatprep.subr.bf16.mxu0 0
    %267 = vmatpush1.bf16.msra.mxu0 %v248
    %268 = vmatprep.subr.bf16.mxu0 0
    %269 = vmatpush1.bf16.msra.mxu0 %v249
    %270 = vmatprep.subr.bf16.mxu0 0
    %271 = vmatpush1.bf16.msra.mxu0 %v250
    %272 = vmatprep.subr.bf16.mxu0 0
    %273 = vmatpush1.bf16.msra.mxu0 %v251
    %274 = vmatprep.subr.bf16.mxu0 0
    %275 = vmatpush1.bf16.msra.mxu0 %v252
    %276 = vmatprep.subr.bf16.mxu0 0
    %277 = vmatpush1.bf16.msra.mxu0 %v253
    %278 = vmatprep.subr.bf16.mxu0 0
    %279 = vmatpush1.bf16.msra.mxu0 0
    %280 = vmatprep.subr.bf16.mxu0 0
    %281 = vmatpush1.bf16.msra.mxu0 0
    %282 = vmatprep.subr.bf16.mxu0 0
    %283 = vmatpush1.bf16.msra.mxu0 0
    %284 = vmatprep.subr.bf16.mxu0 0
    %285 = vmatpush1.bf16.msra.mxu0 0
    %286 = vmatprep.subr.bf16.mxu0 0
    %287 = vmatpush1.bf16.msra.mxu0 0
    %288 = vmatprep.subr.bf16.mxu0 0
    %289 = vmatpush1.bf16.msra.mxu0 0
    %290 = vmatprep.subr.bf16.mxu0 0
    %291 = vmatpush1.bf16.msra.mxu0 0
    %292 = vmatprep.subr.bf16.mxu0 0
    %293 = vmatpush1.bf16.msra.mxu0 0
    %294 = vmatprep.mubr.bf16.mxu0 0
    %295 = vmatmul.mubr.bf16.gmra.mrb[0].mxu0 %v148
    %v296 = vpop.f32.mrb[0].mxu0
    %v297 = vadd.f32 %v209, %v296
    %v298 = vpop.f32.mrb[0].mxu0
    %v299 = vpop.f32.mrb[0].mxu0
    %v300 = vpop.f32.mrb[0].mxu0
    %301 = vdwg.mxu0
    %v302 = vlaneseq
    %v303 = vshrl.u32 %v302, 7
    %v304 = vsub.s32 0, %v303
    %v305 = vrot.slane %v125, %v304
    %v306 = vadd.f32 %v297, %v305
    %v307 = vmax.f32 %v306, 0.0
    %v308 = vlaneseq
    %v309 = vshrl.u32 %v308, 7
    %v310 = vsub.s32 0, %v309
    %v311 = vrot.slane %v126, %v310
    %v312 = vmul.f32 %v307, %v311
    %313 = vadd.xlane.f32.xlu0 %v312
    %v314 = vpop.xlane.xlu0 %313
    %v315 = vlaneseq
    %v316 = vshrl.u32 %v315, 7
    %v317 = vsub.s32 0, %v316
    %v318 = vrot.slane %v127, %v317
    %v319 = vadd.f32 %v314, %v318
    %vm320 = vcmask 7168
    %321 = vst.msk [vmem:[%s6] sm:$0xff] %vm320, %v319
    // Predicated region
    $region34: #{tpu_custom_call.1} parent=1 // pred_check
      _
    $region35: #{tpu_custom_call.1} parent=1 // pred_check_branch
      %323 = sbr.rel (0) target = $region37
    $region36: #{tpu_custom_call.1} parent=1 // pred_region
      _
    $region37: #{tpu_custom_call.1} parent=1 // pred_fallthru
      _
    // Predicated region
    $region38: #{tpu_custom_call.1} parent=1 // pred_check
      _
    $region39: #{tpu_custom_call.1} parent=1 // pred_check_branch
      %325 = sbr.rel (0) target = $region41
    $region40: #{tpu_custom_call.1} parent=1 // pred_region
      _
    $region41: #{tpu_custom_call.1} parent=1 // pred_fallthru
      _
    %326 = vsyncpa [#allocation3], 1
    %327 = vsyncpa [#allocation5], 1

</llo_original>
